<compile_context>
chip_gen: v7x
topology: tpu7x:2x2x1
jax: 0.10.0
libtpu: 0.0.40
codegen_flags: <defaults>
</compile_context>

<pallas_src>
import jax
import jax.numpy as jnp
import numpy as np
from jax import lax
from jax.experimental import pallas as pl
from jax.experimental.pallas import tpu as pltpu


def get_padding(kernel_size, dilation=1):
    return int((kernel_size * dilation - dilation) / 2)


# ----------------------------------------------------------------------------- MDC kernel
def _make_mdc_kernel(offsets, stride, padl, T, T_out, Cin, Cout, with_post):
    """Fused MDC block in channels-on-sublanes / time-on-lanes layout:
    mean of dilated convs -> strided 3-tap conv_out -> leaky_relu(0.1),
    optionally followed by the fused conv_post (last layer)."""
    f32 = jnp.float32

    def kernel(*refs):
        it = iter(refs)
        x_ref = next(it)
        wd_ref = next(it)
        bd_ref = next(it)
        wo_ref = next(it)
        bo_ref = next(it)
        s_ref = next(it) if stride > 1 else None
        if with_post:
            wp_ref = next(it)
            bp_ref = next(it)
        y_ref = next(it)
        if with_post:
            p_ref = next(it)
        xpad_ref = next(it)
        zpad_ref = next(it)
        if with_post:
            ppad_ref = next(it)

        # --- stage the input with zero time-halos (lane halos of width `padl`) in VMEM.
        xpad_ref[:, 0:padl] = jnp.zeros((Cin, padl), f32)
        xpad_ref[:, padl:padl + T] = x_ref[0, :, :].astype(f32)
        xpad_ref[:, padl + T:padl + T + padl] = jnp.zeros((Cin, padl), f32)

        # --- dilated convs: one small (Cout,Cin)@(Cin,T) matmul per distinct time offset
        #     (per-offset weights pre-summed and pre-scaled by 1/num_dilations in wrapper).
        acc = None
        for i, off in enumerate(offsets):
            tap = xpad_ref[:, padl + off:padl + off + T]
            d = jnp.dot(wd_ref[i, :, :], tap, preferred_element_type=f32)
            acc = d if acc is None else acc + d
        acc = acc + bd_ref[...]                               # (Cout, T) + (Cout, 1)

        # --- 3-tap conv_out at stride 1 on a zero-haloed copy of the accumulator ...
        zpad_ref[:, 0:1] = jnp.zeros((Cout, 1), f32)
        zpad_ref[:, 1:1 + T] = acc
        zpad_ref[:, 1 + T:2 + T] = jnp.zeros((Cout, 1), f32)
        z = bo_ref[...] + jnp.dot(wo_ref[0, :, :], zpad_ref[:, 0:T],
                                  preferred_element_type=f32)
        z = z + jnp.dot(wo_ref[1, :, :], zpad_ref[:, 1:1 + T], preferred_element_type=f32)
        z = z + jnp.dot(wo_ref[2, :, :], zpad_ref[:, 2:2 + T], preferred_element_type=f32)
        # ... then the stride as an exact one-hot selection matmul  y[:, t] = z[:, s*t]
        #     (keeps all reads contiguous; avoids strided lane access / transposes).
        if stride > 1:
            y = jnp.dot(z, s_ref[...], preferred_element_type=f32)   # (Cout,T)@(T,T_out)
        else:
            y = z
        y = jnp.where(y >= 0.0, y, 0.1 * y)                   # leaky_relu(0.1)
        y_ref[0] = y.astype(y_ref.dtype)                      # lane-dense (Cout, T_out)

        if with_post:
            # conv_post fused in: 3-tap conv over y, emitted lane-dense as (1, T_out).
            ppad_ref[:, 0:1] = jnp.zeros((Cout, 1), f32)
            ppad_ref[:, 1:1 + T_out] = y
            ppad_ref[:, 1 + T_out:2 + T_out] = jnp.zeros((Cout, 1), f32)
            p = bp_ref[...] + jnp.dot(wp_ref[0, :, :], ppad_ref[:, 0:T_out],
                                      preferred_element_type=f32)
            p = p + jnp.dot(wp_ref[1, :, :], ppad_ref[:, 1:1 + T_out],
                            preferred_element_type=f32)
            p = p + jnp.dot(wp_ref[2, :, :], ppad_ref[:, 2:2 + T_out],
                            preferred_element_type=f32)
            p_ref[0] = p.astype(p_ref.dtype)

    return kernel


def mdc_forward(x_nct, p, *, kernel, post=None):
    """One MDC block in NCL layout.  If `post` is given (last layer), also returns the
    fused conv_post output of shape (B, 1, T_out)."""
    B, Cin, T = x_nct.shape
    wd, bd, wo, bo = p["wd"], p["bd"], p["wo"], p["bo"]
    dils, stride = p["dils"], p["stride"]
    nd, K = len(dils), kernel
    Cout = wd.shape[-1]
    T_out = (T - 1) // stride + 1                 # = floor((T + 2 - 3)/stride) + 1

    # Group dilated-conv taps by time offset; fold 1/nd into weights, pre-sum biases.
    groups = {}
    for di, d in enumerate(dils):
        pad = get_padding(K, d)
        for k in range(K):
            off = k * d - pad
            w_oi = jnp.transpose(wd[di, k], (1, 0))           # (Cout, Cin)
            groups[off] = w_oi if off not in groups else groups[off] + w_oi
    offsets = tuple(sorted(groups))
    n_off = len(offsets)
    wd_g = (jnp.stack([groups[o] for o in offsets], axis=0) / nd).astype(jnp.float32)
    bd_g = (jnp.sum(bd, axis=0) / nd).reshape(Cout, 1).astype(jnp.float32)
    wo_g = jnp.transpose(wo, (0, 2, 1)).astype(jnp.float32)   # (3, out, in)
    bo_g = bo.reshape(Cout, 1).astype(jnp.float32)
    padl = max(1, max(abs(o) for o in offsets))               # time halo width (lanes)

    in_arrays = [x_nct.astype(jnp.float32), wd_g, bd_g, wo_g, bo_g]
    in_specs = [
        pl.BlockSpec((1, Cin, T), lambda b: (b, 0, 0)),
        pl.BlockSpec((n_off, Cout, Cin), lambda b: (0, 0, 0)),
        pl.BlockSpec((Cout, 1), lambda b: (0, 0)),
        pl.BlockSpec((3, Cout, Cout), lambda b: (0, 0, 0)),
        pl.BlockSpec((Cout, 1), lambda b: (0, 0)),
    ]
    if stride > 1:
        sel = (jnp.arange(T)[:, None] == stride * jnp.arange(T_out)[None, :]
               ).astype(jnp.float32)                          # (T, T_out) one-hot
        in_arrays.append(sel)
        in_specs.append(pl.BlockSpec((T, T_out), lambda b: (0, 0)))

    scratch = [
        pltpu.VMEM((Cin, padl + T + padl), jnp.float32),      # zero-haloed input
        pltpu.VMEM((Cout, T + 2), jnp.float32),               # zero-haloed conv_out input
    ]
    cparams = pltpu.CompilerParams(
        dimension_semantics=("parallel",),
        vmem_limit_bytes=48 * 1024 * 1024)
    kern = _make_mdc_kernel(offsets, stride, padl, T, T_out, Cin, Cout,
                            with_post=(post is not None))

    if post is None:
        return pl.pallas_call(
            kern,
            out_shape=jax.ShapeDtypeStruct((B, Cout, T_out), jnp.float32),
            grid_spec=pltpu.PrefetchScalarGridSpec(
                num_scalar_prefetch=0,
                grid=(B,),
                in_specs=in_specs,
                out_specs=pl.BlockSpec((1, Cout, T_out), lambda b: (b, 0, 0)),
                scratch_shapes=scratch),
            compiler_params=cparams,
        )(*in_arrays)

    wp, bp = post
    wp_g = jnp.transpose(wp, (0, 2, 1)).astype(jnp.float32)   # (3, 1, Cout)
    bp_g = bp.astype(jnp.float32)                             # (1, 1)
    in_arrays += [wp_g, bp_g]
    in_specs += [pl.BlockSpec((3, 1, Cout), lambda b: (0, 0, 0)),
                 pl.BlockSpec((1, 1), lambda b: (0, 0))]
    scratch.append(pltpu.VMEM((Cout, T_out + 2), jnp.float32))  # zero-haloed conv_post input
    y, pout = pl.pallas_call(
        kern,
        out_shape=(jax.ShapeDtypeStruct((B, Cout, T_out), jnp.float32),
                   jax.ShapeDtypeStruct((B, 1, T_out), jnp.float32)),
        grid_spec=pltpu.PrefetchScalarGridSpec(
            num_scalar_prefetch=0,
            grid=(B,),
            in_specs=in_specs,
            out_specs=[pl.BlockSpec((1, Cout, T_out), lambda b: (b, 0, 0)),
                       pl.BlockSpec((1, 1, T_out), lambda b: (b, 0, 0))],
            scratch_shapes=scratch),
        compiler_params=cparams,
    )(*in_arrays)
    return y, pout


# ---------------------------------------------------------------------------- full module
def subband_discriminator_forward(x_nct, params, post, kernel):
    """x_nct: (B, C_init, T) exactly like PyTorch.  Returns (flat, fmap); fmap stays NCL
    (no wrapper transposes anywhere)."""
    x = x_nct
    fmap = []
    post_out = None
    for li, p in enumerate(params):
        if li == len(params) - 1:
            x, post_out = mdc_forward(x, p, kernel=kernel, post=post)  # conv_post fused
        else:
            x = mdc_forward(x, p, kernel=kernel, post=None)
        fmap.append(x)                                  # already (B, C, T) == NCL
    x_flat = post_out.reshape(post_out.shape[0], -1)    # == torch.flatten(x, 1, -1)
    return x_flat, fmap


def init_params(key, init_channel, channels, kernel, strides, dilations):
    params = []
    cin = init_channel
    keys = jax.random.split(key, len(channels) + 1)
    for li, (c, s, dils) in enumerate(zip(channels, strides, dilations)):
        k1, k2, k3, k4 = jax.random.split(keys[li], 4)
        nd = len(dils)
        params.append(dict(
            wd=0.1 * jax.random.normal(k1, (nd, kernel, cin, c), jnp.float32),
            bd=0.1 * jax.random.normal(k2, (nd, 1, c), jnp.float32),
            wo=0.1 * jax.random.normal(k3, (3, c, c), jnp.float32),
            bo=0.1 * jax.random.normal(k4, (1, c), jnp.float32),
            dils=tuple(dils), stride=s))
        cin = c
    kp1, kp2 = jax.random.split(keys[-1], 2)
    post = (0.1 * jax.random.normal(kp1, (3, cin, 1), jnp.float32),
            0.1 * jax.random.normal(kp2, (1, 1), jnp.float32))
    return params, post


# ------------------------------------------------------------------------ pure-JAX reference
def _ref_conv1d(x_btc, w_kio, b, dilation, stride, padding):
    out = lax.conv_general_dilated(
        x_btc, w_kio, window_strides=(stride,), padding=[(padding, padding)],
        rhs_dilation=(dilation,), dimension_numbers=("NWC", "WIO", "NWC"),
        precision=lax.Precision.HIGHEST)
    return out + b.reshape(1, 1, -1)


def ref_forward(x_nct, params, post, kernel):
    x = jnp.transpose(x_nct, (0, 2, 1))                # NWC for lax.conv
    fmap = []
    for p in params:
        xs = None
        for i, d in enumerate(p["dils"]):
            y = _ref_conv1d(x, p["wd"][i], p["bd"][i], d, 1, get_padding(kernel, d))
            xs = y if xs is None else xs + y
        x = xs / len(p["dils"])
        x = _ref_conv1d(x, p["wo"], p["bo"], 1, p["stride"], 1)
        x = jnp.where(x >= 0, x, 0.1 * x)
        fmap.append(jnp.transpose(x, (0, 2, 1)))       # back to NCL for comparison
    wp, bp = post
    x = _ref_conv1d(x, wp, bp, 1, 1, 1)                # (B, T_out, 1)
    return x.reshape(x.shape[0], -1), fmap


if __name__ == "__main__":
    key = jax.random.PRNGKey(0)
    kparam, kx = jax.random.split(key)

    init_channel = 4
    channels = [8, 16]
    kernel = 3
    strides = [1, 2]
    dilations = [[1, 2], [1, 2, 3]]

    params, post = init_params(kparam, init_channel, channels, kernel, strides, dilations)
    x = jax.random.normal(kx, (2, init_channel, 16), jnp.float32)  # (B, C, T) like PyTorch

    out, fmap = subband_discriminator_forward(x, params, post, kernel)
    out = jax.block_until_ready(out)
    fmap = [jax.block_until_ready(f) for f in fmap]

    # sanity check against a pure-JAX reference
    ref_out, ref_fmap = ref_forward(x, params, post, kernel)
    assert out.shape == ref_out.shape
    np.testing.assert_allclose(np.asarray(out), np.asarray(ref_out), atol=1e-2, rtol=1e-2)
    for a, b in zip(fmap, ref_fmap):
        assert a.shape == b.shape
        np.testing.assert_allclose(np.asarray(a), np.asarray(b), atol=1e-2, rtol=1e-2)

    print("KERNEL_OK")
</pallas_src>

<mosaic_0001>
module attributes {stable_mosaic.version = 11 : i64} {
  func.func @kernel(%arg0: i32, %arg1: memref<1x4x16xf32, #tpu.memory_space<vmem>>, %arg2: memref<5x8x4xf32, #tpu.memory_space<vmem>>, %arg3: memref<8x1xf32, #tpu.memory_space<vmem>>, %arg4: memref<3x8x8xf32, #tpu.memory_space<vmem>>, %arg5: memref<8x1xf32, #tpu.memory_space<vmem>>, %arg6: memref<1x8x16xf32, #tpu.memory_space<vmem>>, %arg7: memref<4x20xf32, #tpu.memory_space<vmem>>, %arg8: memref<8x18xf32, #tpu.memory_space<vmem>>) attributes {dimension_semantics = [#tpu.dimension_semantics<parallel>], iteration_bounds = array<i64: 2>, scalar_prefetch = 0 : i64, scratch_operands = 2 : i64, tpu.core_type = #tpu.core_type<tc>, window_params = [{transform_indices = @transform_0, window_bounds = array<i64: 1, 4, 16>}, {pipeline_mode = #tpu.pipeline_mode<synchronous>, transform_indices = @transform_1, window_bounds = array<i64: 5, 8, 4>}, {pipeline_mode = #tpu.pipeline_mode<synchronous>, transform_indices = @transform_2, window_bounds = array<i64: 8, 1>}, {pipeline_mode = #tpu.pipeline_mode<synchronous>, transform_indices = @transform_3, window_bounds = array<i64: 3, 8, 8>}, {pipeline_mode = #tpu.pipeline_mode<synchronous>, transform_indices = @transform_4, window_bounds = array<i64: 8, 1>}, {transform_indices = @transform_5, window_bounds = array<i64: 1, 8, 16>}]} {
    %cst = arith.constant 0.000000e+00 : f32
    %0 = vector.broadcast %cst : f32 to vector<4x2xf32>
    %c0 = arith.constant 0 : index
    %c0_0 = arith.constant 0 : index
    %1 = vector.load %arg7[%c0, %c0_0] : memref<4x20xf32, #tpu.memory_space<vmem>>, vector<4x2xf32>
    tpu.vector_store %arg7[%c0, %c0_0], %0 {strides = array<i32>} : memref<4x20xf32, #tpu.memory_space<vmem>>, vector<4x2xf32>,
    %c0_1 = arith.constant 0 : index
    %c0_2 = arith.constant 0 : index
    %c0_3 = arith.constant 0 : index
    %2 = vector.load %arg1[%c0_1, %c0_2, %c0_3] : memref<1x4x16xf32, #tpu.memory_space<vmem>>, vector<1x4x16xf32>
    %3 = vector.shape_cast %2 : vector<1x4x16xf32> to vector<4x16xf32>
    %c0_4 = arith.constant 0 : index
    %c2 = arith.constant 2 : index
    %4 = vector.load %arg7[%c0_4, %c2] : memref<4x20xf32, #tpu.memory_space<vmem>>, vector<4x16xf32>
    tpu.vector_store %arg7[%c0_4, %c2], %3 {strides = array<i32>} : memref<4x20xf32, #tpu.memory_space<vmem>>, vector<4x16xf32>,
    %cst_5 = arith.constant 0.000000e+00 : f32
    %5 = vector.broadcast %cst_5 : f32 to vector<4x2xf32>
    %c0_6 = arith.constant 0 : index
    %c18 = arith.constant 18 : index
    %6 = vector.load %arg7[%c0_6, %c18] : memref<4x20xf32, #tpu.memory_space<vmem>>, vector<4x2xf32>
    tpu.vector_store %arg7[%c0_6, %c18], %5 {strides = array<i32>} : memref<4x20xf32, #tpu.memory_space<vmem>>, vector<4x2xf32>,
    %c0_7 = arith.constant 0 : index
    %c0_8 = arith.constant 0 : index
    %7 = vector.load %arg7[%c0_7, %c0_8] : memref<4x20xf32, #tpu.memory_space<vmem>>, vector<4x16xf32>
    %c0_9 = arith.constant 0 : index
    %c0_10 = arith.constant 0 : index
    %c0_11 = arith.constant 0 : index
    %8 = vector.load %arg2[%c0_9, %c0_10, %c0_11] : memref<5x8x4xf32, #tpu.memory_space<vmem>>, vector<1x8x4xf32>
    %9 = vector.shape_cast %8 : vector<1x8x4xf32> to vector<8x4xf32>
    %cst_12 = arith.constant dense<0.000000e+00> : vector<8x16xf32>
    %10 = tpu.matmul %9, %7, %cst_12 {dimension_numbers = #tpu.dot_dimension_numbers<[1], [0], [0], [1], [0, 0, 1, 1], [], []>} : vector<8x4xf32>, vector<4x16xf32>, vector<8x16xf32> -> vector<8x16xf32>
    %c0_13 = arith.constant 0 : index
    %c1 = arith.constant 1 : index
    %11 = vector.load %arg7[%c0_13, %c1] : memref<4x20xf32, #tpu.memory_space<vmem>>, vector<4x16xf32>
    %c1_14 = arith.constant 1 : index
    %c0_15 = arith.constant 0 : index
    %c0_16 = arith.constant 0 : index
    %12 = vector.load %arg2[%c1_14, %c0_15, %c0_16] : memref<5x8x4xf32, #tpu.memory_space<vmem>>, vector<1x8x4xf32>
    %13 = vector.shape_cast %12 : vector<1x8x4xf32> to vector<8x4xf32>
    %cst_17 = arith.constant dense<0.000000e+00> : vector<8x16xf32>
    %14 = tpu.matmul %13, %11, %cst_17 {dimension_numbers = #tpu.dot_dimension_numbers<[1], [0], [0], [1], [0, 0, 1, 1], [], []>} : vector<8x4xf32>, vector<4x16xf32>, vector<8x16xf32> -> vector<8x16xf32>
    %15 = arith.addf %10, %14 : vector<8x16xf32>
    %c0_18 = arith.constant 0 : index
    %c2_19 = arith.constant 2 : index
    %16 = vector.load %arg7[%c0_18, %c2_19] : memref<4x20xf32, #tpu.memory_space<vmem>>, vector<4x16xf32>
    %c2_20 = arith.constant 2 : index
    %c0_21 = arith.constant 0 : index
    %c0_22 = arith.constant 0 : index
    %17 = vector.load %arg2[%c2_20, %c0_21, %c0_22] : memref<5x8x4xf32, #tpu.memory_space<vmem>>, vector<1x8x4xf32>
    %18 = vector.shape_cast %17 : vector<1x8x4xf32> to vector<8x4xf32>
    %cst_23 = arith.constant dense<0.000000e+00> : vector<8x16xf32>
    %19 = tpu.matmul %18, %16, %cst_23 {dimension_numbers = #tpu.dot_dimension_numbers<[1], [0], [0], [1], [0, 0, 1, 1], [], []>} : vector<8x4xf32>, vector<4x16xf32>, vector<8x16xf32> -> vector<8x16xf32>
    %20 = arith.addf %15, %19 : vector<8x16xf32>
    %c0_24 = arith.constant 0 : index
    %c3 = arith.constant 3 : index
    %21 = vector.load %arg7[%c0_24, %c3] : memref<4x20xf32, #tpu.memory_space<vmem>>, vector<4x16xf32>
    %c3_25 = arith.constant 3 : index
    %c0_26 = arith.constant 0 : index
    %c0_27 = arith.constant 0 : index
    %22 = vector.load %arg2[%c3_25, %c0_26, %c0_27] : memref<5x8x4xf32, #tpu.memory_space<vmem>>, vector<1x8x4xf32>
    %23 = vector.shape_cast %22 : vector<1x8x4xf32> to vector<8x4xf32>
    %cst_28 = arith.constant dense<0.000000e+00> : vector<8x16xf32>
    %24 = tpu.matmul %23, %21, %cst_28 {dimension_numbers = #tpu.dot_dimension_numbers<[1], [0], [0], [1], [0, 0, 1, 1], [], []>} : vector<8x4xf32>, vector<4x16xf32>, vector<8x16xf32> -> vector<8x16xf32>
    %25 = arith.addf %20, %24 : vector<8x16xf32>
    %c0_29 = arith.constant 0 : index
    %c4 = arith.constant 4 : index
    %26 = vector.load %arg7[%c0_29, %c4] : memref<4x20xf32, #tpu.memory_space<vmem>>, vector<4x16xf32>
    %c4_30 = arith.constant 4 : index
    %c0_31 = arith.constant 0 : index
    %c0_32 = arith.constant 0 : index
    %27 = vector.load %arg2[%c4_30, %c0_31, %c0_32] : memref<5x8x4xf32, #tpu.memory_space<vmem>>, vector<1x8x4xf32>
    %28 = vector.shape_cast %27 : vector<1x8x4xf32> to vector<8x4xf32>
    %cst_33 = arith.constant dense<0.000000e+00> : vector<8x16xf32>
    %29 = tpu.matmul %28, %26, %cst_33 {dimension_numbers = #tpu.dot_dimension_numbers<[1], [0], [0], [1], [0, 0, 1, 1], [], []>} : vector<8x4xf32>, vector<4x16xf32>, vector<8x16xf32> -> vector<8x16xf32>
    %30 = arith.addf %25, %29 : vector<8x16xf32>
    %c0_34 = arith.constant 0 : index
    %c0_35 = arith.constant 0 : index
    %31 = vector.load %arg3[%c0_34, %c0_35] : memref<8x1xf32, #tpu.memory_space<vmem>>, vector<8x1xf32>
    %32 = vector.broadcast %31 : vector<8x1xf32> to vector<8x16xf32>
    %33 = arith.addf %30, %32 : vector<8x16xf32>
    %cst_36 = arith.constant 0.000000e+00 : f32
    %34 = vector.broadcast %cst_36 : f32 to vector<8x1xf32>
    %c0_37 = arith.constant 0 : index
    %c0_38 = arith.constant 0 : index
    %35 = vector.load %arg8[%c0_37, %c0_38] : memref<8x18xf32, #tpu.memory_space<vmem>>, vector<8x1xf32>
    tpu.vector_store %arg8[%c0_37, %c0_38], %34 {strides = array<i32>} : memref<8x18xf32, #tpu.memory_space<vmem>>, vector<8x1xf32>,
    %c0_39 = arith.constant 0 : index
    %c1_40 = arith.constant 1 : index
    %36 = vector.load %arg8[%c0_39, %c1_40] : memref<8x18xf32, #tpu.memory_space<vmem>>, vector<8x16xf32>
    tpu.vector_store %arg8[%c0_39, %c1_40], %33 {strides = array<i32>} : memref<8x18xf32, #tpu.memory_space<vmem>>, vector<8x16xf32>,
    %cst_41 = arith.constant 0.000000e+00 : f32
    %37 = vector.broadcast %cst_41 : f32 to vector<8x1xf32>
    %c0_42 = arith.constant 0 : index
    %c17 = arith.constant 17 : index
    %38 = vector.load %arg8[%c0_42, %c17] : memref<8x18xf32, #tpu.memory_space<vmem>>, vector<8x1xf32>
    tpu.vector_store %arg8[%c0_42, %c17], %37 {strides = array<i32>} : memref<8x18xf32, #tpu.memory_space<vmem>>, vector<8x1xf32>,
    %c0_43 = arith.constant 0 : index
    %c0_44 = arith.constant 0 : index
    %39 = vector.load %arg5[%c0_43, %c0_44] : memref<8x1xf32, #tpu.memory_space<vmem>>, vector<8x1xf32>
    %c0_45 = arith.constant 0 : index
    %c0_46 = arith.constant 0 : index
    %c0_47 = arith.constant 0 : index
    %40 = vector.load %arg4[%c0_45, %c0_46, %c0_47] : memref<3x8x8xf32, #tpu.memory_space<vmem>>, vector<1x8x8xf32>
    %41 = vector.shape_cast %40 : vector<1x8x8xf32> to vector<8x8xf32>
    %c0_48 = arith.constant 0 : index
    %c0_49 = arith.constant 0 : index
    %42 = vector.load %arg8[%c0_48, %c0_49] : memref<8x18xf32, #tpu.memory_space<vmem>>, vector<8x16xf32>
    %cst_50 = arith.constant dense<0.000000e+00> : vector<8x16xf32>
    %43 = tpu.matmul %41, %42, %cst_50 {dimension_numbers = #tpu.dot_dimension_numbers<[1], [0], [0], [1], [0, 0, 1, 1], [], []>} : vector<8x8xf32>, vector<8x16xf32>, vector<8x16xf32> -> vector<8x16xf32>
    %44 = vector.broadcast %39 : vector<8x1xf32> to vector<8x16xf32>
    %45 = arith.addf %44, %43 : vector<8x16xf32>
    %c1_51 = arith.constant 1 : index
    %c0_52 = arith.constant 0 : index
    %c0_53 = arith.constant 0 : index
    %46 = vector.load %arg4[%c1_51, %c0_52, %c0_53] : memref<3x8x8xf32, #tpu.memory_space<vmem>>, vector<1x8x8xf32>
    %47 = vector.shape_cast %46 : vector<1x8x8xf32> to vector<8x8xf32>
    %c0_54 = arith.constant 0 : index
    %c1_55 = arith.constant 1 : index
    %48 = vector.load %arg8[%c0_54, %c1_55] : memref<8x18xf32, #tpu.memory_space<vmem>>, vector<8x16xf32>
    %cst_56 = arith.constant dense<0.000000e+00> : vector<8x16xf32>
    %49 = tpu.matmul %47, %48, %cst_56 {dimension_numbers = #tpu.dot_dimension_numbers<[1], [0], [0], [1], [0, 0, 1, 1], [], []>} : vector<8x8xf32>, vector<8x16xf32>, vector<8x16xf32> -> vector<8x16xf32>
    %50 = arith.addf %45, %49 : vector<8x16xf32>
    %c2_57 = arith.constant 2 : index
    %c0_58 = arith.constant 0 : index
    %c0_59 = arith.constant 0 : index
    %51 = vector.load %arg4[%c2_57, %c0_58, %c0_59] : memref<3x8x8xf32, #tpu.memory_space<vmem>>, vector<1x8x8xf32>
    %52 = vector.shape_cast %51 : vector<1x8x8xf32> to vector<8x8xf32>
    %c0_60 = arith.constant 0 : index
    %c2_61 = arith.constant 2 : index
    %53 = vector.load %arg8[%c0_60, %c2_61] : memref<8x18xf32, #tpu.memory_space<vmem>>, vector<8x16xf32>
    %cst_62 = arith.constant dense<0.000000e+00> : vector<8x16xf32>
    %54 = tpu.matmul %52, %53, %cst_62 {dimension_numbers = #tpu.dot_dimension_numbers<[1], [0], [0], [1], [0, 0, 1, 1], [], []>} : vector<8x8xf32>, vector<8x16xf32>, vector<8x16xf32> -> vector<8x16xf32>
    %55 = arith.addf %50, %54 : vector<8x16xf32>
    %cst_63 = arith.constant 0.000000e+00 : f32
    %56 = vector.broadcast %cst_63 : f32 to vector<8x16xf32>
    %57 = arith.cmpf oge, %55, %56 : vector<8x16xf32>
    %cst_64 = arith.constant 1.000000e-01 : f32
    %58 = vector.broadcast %cst_64 : f32 to vector<8x16xf32>
    %59 = arith.mulf %58, %55 : vector<8x16xf32>
    %60 = arith.select %57, %55, %59 : vector<8x16xi1>, vector<8x16xf32>
    %c0_65 = arith.constant 0 : index
    %c0_66 = arith.constant 0 : index
    %c0_67 = arith.constant 0 : index
    %61 = vector.load %arg6[%c0_65, %c0_66, %c0_67] : memref<1x8x16xf32, #tpu.memory_space<vmem>>, vector<1x8x16xf32>
    %62 = vector.shape_cast %61 : vector<1x8x16xf32> to vector<8x16xf32>
    %63 = vector.shape_cast %60 : vector<8x16xf32> to vector<1x8x16xf32>
    tpu.vector_store %arg6[%c0_65, %c0_66, %c0_67], %63 {strides = array<i32>} : memref<1x8x16xf32, #tpu.memory_space<vmem>>, vector<1x8x16xf32>,
    return
  }
  func.func @transform_0(%arg0: i32) -> (i32, i32, i32) {
    %c0_i32 = arith.constant 0 : i32
    %c0_i32_0 = arith.constant 0 : i32
    %c0_i32_1 = arith.constant 0 : i32
    return %arg0, %c0_i32, %c0_i32_0 : i32, i32, i32
  }
  func.func @transform_1(%arg0: i32) -> (i32, i32, i32) {
    %c0_i32 = arith.constant 0 : i32
    %c0_i32_0 = arith.constant 0 : i32
    %c0_i32_1 = arith.constant 0 : i32
    %c0_i32_2 = arith.constant 0 : i32
    return %c0_i32, %c0_i32_0, %c0_i32_1 : i32, i32, i32
  }
  func.func @transform_2(%arg0: i32) -> (i32, i32) {
    %c0_i32 = arith.constant 0 : i32
    %c0_i32_0 = arith.constant 0 : i32
    %c0_i32_1 = arith.constant 0 : i32
    return %c0_i32, %c0_i32_0 : i32, i32
  }
  func.func @transform_3(%arg0: i32) -> (i32, i32, i32) {
    %c0_i32 = arith.constant 0 : i32
    %c0_i32_0 = arith.constant 0 : i32
    %c0_i32_1 = arith.constant 0 : i32
    %c0_i32_2 = arith.constant 0 : i32
    return %c0_i32, %c0_i32_0, %c0_i32_1 : i32, i32, i32
  }
  func.func @transform_4(%arg0: i32) -> (i32, i32) {
    %c0_i32 = arith.constant 0 : i32
    %c0_i32_0 = arith.constant 0 : i32
    %c0_i32_1 = arith.constant 0 : i32
    return %c0_i32, %c0_i32_0 : i32, i32
  }
  func.func @transform_5(%arg0: i32) -> (i32, i32, i32) {
    %c0_i32 = arith.constant 0 : i32
    %c0_i32_0 = arith.constant 0 : i32
    %c0_i32_1 = arith.constant 0 : i32
    return %arg0, %c0_i32, %c0_i32_0 : i32, i32, i32
  }
}

</mosaic_0001>

<llo_original>
// kernel: tpu_custom_call.1
$region0: #{tpu_custom_call.1}
  #allocation0 [shape = 'u32[]', space=smem, size = 0x4, offset = 0x4, fixed_abs, tag = 'smem constant byte address 0x4 - core index']
  #allocation1 [shape = 'u32[144,128]{1,0:T(1,128)}', space=vmem, size = 0x12000, scoped, tag = 'internal scratch']
  #allocation2 [shape = 'f32[4,20]{1,0:T(4,128)}', space=vmem, size = 0x800, scoped, tag = 'scratch operand']
  #allocation3 [shape = 'f32[8,18]{1,0:T(8,128)}', space=vmem, size = 0x1000, scoped, tag = 'scratch operand']
  %s0 = inlined_call_operand.vmem [shape: f32[2,4,16], index: 0, kind: input, shape index: {}]
  %s1 = inlined_call_operand.vmem [shape: f32[5,8,4], index: 1, kind: input, shape index: {}]
  %s2 = inlined_call_operand.vmem [shape: f32[8,1], index: 2, kind: input, shape index: {}]
  %s3 = inlined_call_operand.vmem [shape: f32[3,8,8], index: 3, kind: input, shape index: {}]
  %s4 = inlined_call_operand.vmem [shape: f32[8,1], index: 4, kind: input, shape index: {}]
  %s5 = inlined_call_operand.hbm [shape: f32[2,8,16], index: 5, kind: output, shape index: {}]
  %s6 = sld [smem:[#allocation0]]
  $region53: #{tpu_custom_call.1} parent=0
    _
  %s8 = ssub.s32 1, %s6
  %s9 = scalar_select 0, %s8, %s6
  $region1: #{tpu_custom_call.1} parent=0
    #allocation4 [shape = 'u8[8192]{0}', space=vmem, size = 0x2000, scoped, tag = 'output window, operand 0']
    #allocation5 [shape = 's32[2]{0}', space=sflag, size = 0x8, scoped, tag = 'scoped memory for tpu_custom_call.1']
    %10 = vsyncpa [#allocation5], 0
    %s11 = scalar_lea.sflag [#allocation5], 1
    %12 = vsyncpa %s11, 0
    loop: start=0, step=1, limit=4
    $region2: #{tpu_custom_call.1} parent=1 // loop_pre_header
      _
    $region3: #{tpu_custom_call.1} parent=1 // loop_header
      %s14 = sphi 0, %s18
      %p15 = scmp.ge.s32.totalorder %s14, 4
      %s24 = sphi 0, %s26
      %s27 = sphi 0, %s24
      %s28 = sphi 0, %s27
      %s44 = sphi 0, %s28
      %s48 = sphi 0, %s48
      %s50 = sphi 0, %s48
      %s51 = sphi 0, %s50
      %s65 = sphi 0, %s51
      %s69 = sphi 0, %s69
      %s71 = sphi 0, %s69
      %s72 = sphi 0, %s71
      %s86 = sphi 0, %s72
      %s90 = sphi 0, %s90
      %s92 = sphi 0, %s90
      %s93 = sphi 0, %s92
      %s107 = sphi 0, %s93
      %s111 = sphi 0, %s111
      %s113 = sphi 0, %s111
      %s114 = sphi 0, %s113
      %s128 = sphi 0, %s114
      %s134 = sphi 0, %s136
      %s137 = sphi 0, %s134
      %s138 = sphi 0, %s137
      %s154 = sphi 0, %s138
    $region4: #{tpu_custom_call.1} parent=1 // loop_header_branch
      %17 = sbr.rel (%p15) target = $region8
    $region5: #{tpu_custom_call.1} parent=1 // loop_body
      %s19 = ssub.s32 %s14, 1
      %s20 = ssub.s32 %s14, 2
      %s21 = sadd.s32 %s14, 1
      %s22 = ssub.s32 %s14, %s21
      %p23 = scmp.eq.s32.totalorder %s22, 0
      %s25 = sadd.s32 %s24, 1
      %s26 = scalar_select %p23, %s24, %s25
      %p29 = pneg %p23
      %p30 = scmp.eq.s32.totalorder %s14, 1
      %p31 = por %p29, %p30
      %p32 = scmp.ne.s32.totalorder %s24, %s27
      %p33 = scmp.eq.s32.totalorder %s14, 0
      %p34 = por %p32, %p33
      %p35 = scmp.ne.s32.totalorder %s24, %s27
      %p36 = scmp.eq.s32.totalorder %s19, 1
      %p37 = por %p35, %p36
      %p38 = scmp.ne.s32.totalorder %s27, %s28
      %p39 = scmp.eq.s32.totalorder %s19, 0
      %p40 = por %p38, %p39
      %p41 = scmp.ne.s32.totalorder %s27, %s28
      %p42 = scmp.eq.s32.totalorder %s20, 1
      %p43 = por %p41, %p42
      %p45 = scmp.ne.s32.totalorder %s28, %s44
      %p46 = scmp.eq.s32.totalorder %s20, 0
      %p47 = por %p45, %p46
      %s49 = sadd.s32 %s48, 1
      %p52 = scmp.eq.s32.totalorder %s14, 1
      %p53 = scmp.ne.s32.totalorder %s48, %s50
      %p54 = scmp.eq.s32.totalorder %s14, 0
      %p55 = por %p53, %p54
      %p56 = scmp.ne.s32.totalorder %s48, %s50
      %p57 = scmp.eq.s32.totalorder %s19, 1
      %p58 = por %p56, %p57
      %p59 = scmp.ne.s32.totalorder %s50, %s51
      %p60 = scmp.eq.s32.totalorder %s19, 0
      %p61 = por %p59, %p60
      %p62 = scmp.ne.s32.totalorder %s50, %s51
      %p63 = scmp.eq.s32.totalorder %s20, 1
      %p64 = por %p62, %p63
      %p66 = scmp.ne.s32.totalorder %s51, %s65
      %p67 = scmp.eq.s32.totalorder %s20, 0
      %p68 = por %p66, %p67
      %s70 = sadd.s32 %s69, 1
      %p73 = scmp.eq.s32.totalorder %s14, 1
      %p74 = scmp.ne.s32.totalorder %s69, %s71
      %p75 = scmp.eq.s32.totalorder %s14, 0
      %p76 = por %p74, %p75
      %p77 = scmp.ne.s32.totalorder %s69, %s71
      %p78 = scmp.eq.s32.totalorder %s19, 1
      %p79 = por %p77, %p78
      %p80 = scmp.ne.s32.totalorder %s71, %s72
      %p81 = scmp.eq.s32.totalorder %s19, 0
      %p82 = por %p80, %p81
      %p83 = scmp.ne.s32.totalorder %s71, %s72
      %p84 = scmp.eq.s32.totalorder %s20, 1
      %p85 = por %p83, %p84
      %p87 = scmp.ne.s32.totalorder %s72, %s86
      %p88 = scmp.eq.s32.totalorder %s20, 0
      %p89 = por %p87, %p88
      %s91 = sadd.s32 %s90, 1
      %p94 = scmp.eq.s32.totalorder %s14, 1
      %p95 = scmp.ne.s32.totalorder %s90, %s92
      %p96 = scmp.eq.s32.totalorder %s14, 0
      %p97 = por %p95, %p96
      %p98 = scmp.ne.s32.totalorder %s90, %s92
      %p99 = scmp.eq.s32.totalorder %s19, 1
      %p100 = por %p98, %p99
      %p101 = scmp.ne.s32.totalorder %s92, %s93
      %p102 = scmp.eq.s32.totalorder %s19, 0
      %p103 = por %p101, %p102
      %p104 = scmp.ne.s32.totalorder %s92, %s93
      %p105 = scmp.eq.s32.totalorder %s20, 1
      %p106 = por %p104, %p105
      %p108 = scmp.ne.s32.totalorder %s93, %s107
      %p109 = scmp.eq.s32.totalorder %s20, 0
      %p110 = por %p108, %p109
      %s112 = sadd.s32 %s111, 1
      %p115 = scmp.eq.s32.totalorder %s14, 1
      %p116 = scmp.ne.s32.totalorder %s111, %s113
      %p117 = scmp.eq.s32.totalorder %s14, 0
      %p118 = por %p116, %p117
      %p119 = scmp.ne.s32.totalorder %s111, %s113
      %p120 = scmp.eq.s32.totalorder %s19, 1
      %p121 = por %p119, %p120
      %p122 = scmp.ne.s32.totalorder %s113, %s114
      %p123 = scmp.eq.s32.totalorder %s19, 0
      %p124 = por %p122, %p123
      %p125 = scmp.ne.s32.totalorder %s113, %s114
      %p126 = scmp.eq.s32.totalorder %s20, 1
      %p127 = por %p125, %p126
      %p129 = scmp.ne.s32.totalorder %s114, %s128
      %p130 = scmp.eq.s32.totalorder %s20, 0
      %p131 = por %p129, %p130
      %s132 = ssub.s32 %s14, %s21
      %p133 = scmp.eq.s32.totalorder %s132, 0
      %s135 = sadd.s32 %s134, 1
      %s136 = scalar_select %p133, %s134, %s135
      %p139 = pneg %p133
      %p140 = scmp.eq.s32.totalorder %s14, 1
      %p141 = por %p139, %p140
      %p142 = scmp.ne.s32.totalorder %s134, %s137
      %p143 = scmp.eq.s32.totalorder %s14, 0
      %p144 = por %p142, %p143
      %p145 = scmp.ne.s32.totalorder %s134, %s137
      %p146 = scmp.eq.s32.totalorder %s19, 1
      %p147 = por %p145, %p146
      %p148 = scmp.ne.s32.totalorder %s137, %s138
      %p149 = scmp.eq.s32.totalorder %s19, 0
      %p150 = por %p148, %p149
      %p151 = scmp.ne.s32.totalorder %s137, %s138
      %p152 = scmp.eq.s32.totalorder %s20, 1
      %p153 = por %p151, %p152
      %p155 = scmp.ne.s32.totalorder %s138, %s154
      %p156 = scmp.eq.s32.totalorder %s20, 0
      %p157 = por %p155, %p156
      %p158 = scmp.le.s32.totalorder 1, %s14
      %p159 = scmp.lt.s32.totalorder %s14, 3
      %p160 = pnand %p158, %p159
      %p161 = pneg %p160
      // Predicated region
      $region9: #{tpu_custom_call.1} parent=5 // pred_check
        _
      $region10: #{tpu_custom_call.1} parent=5 // pred_check_branch
        %163 = sbr.rel (%p160) target = $region12
      $region11: #{tpu_custom_call.1} parent=5 // pred_region
        %s164 = ssub.s32 %s14, 1
        // Predicated region
        $region13: #{tpu_custom_call.1} parent=11 // pred_check
          %p165 = pneg %p61
        $region14: #{tpu_custom_call.1} parent=11 // pred_check_branch
          %167 = sbr.rel (%p165) target = $region16
        $region15: #{tpu_custom_call.1} parent=11 // pred_region
          _
        $region16: #{tpu_custom_call.1} parent=11 // pred_fallthru
          _
        // Predicated region
        $region17: #{tpu_custom_call.1} parent=11 // pred_check
          %p168 = pneg %p82
        $region18: #{tpu_custom_call.1} parent=11 // pred_check_branch
          %170 = sbr.rel (%p168) target = $region20
        $region19: #{tpu_custom_call.1} parent=11 // pred_region
          _
        $region20: #{tpu_custom_call.1} parent=11 // pred_fallthru
          _
        // Predicated region
        $region21: #{tpu_custom_call.1} parent=11 // pred_check
          %p171 = pneg %p103
        $region22: #{tpu_custom_call.1} parent=11 // pred_check_branch
          %173 = sbr.rel (%p171) target = $region24
        $region23: #{tpu_custom_call.1} parent=11 // pred_region
          _
        $region24: #{tpu_custom_call.1} parent=11 // pred_fallthru
          _
        // Predicated region
        $region25: #{tpu_custom_call.1} parent=11 // pred_check
          %p174 = pneg %p124
        $region26: #{tpu_custom_call.1} parent=11 // pred_check_branch
          %176 = sbr.rel (%p174) target = $region28
        $region27: #{tpu_custom_call.1} parent=11 // pred_region
          _
        $region28: #{tpu_custom_call.1} parent=11 // pred_fallthru
          _
      $region12: #{tpu_custom_call.1} parent=5 // pred_fallthru
        _
      %p177 = scmp.lt.s32.totalorder %s14, 2
      // Predicated region
      $region29: #{tpu_custom_call.1} parent=5 // pred_check
        %p178 = pneg %p177
      $region30: #{tpu_custom_call.1} parent=5 // pred_check_branch
        %180 = sbr.rel (%p178) target = $region32
      $region31: #{tpu_custom_call.1} parent=5 // pred_region
        // Predicated region
        $region33: #{tpu_custom_call.1} parent=31 // pred_check
          %p181 = pneg %p34
        $region34: #{tpu_custom_call.1} parent=31 // pred_check_branch
          %183 = sbr.rel (%p181) target = $region36
        $region35: #{tpu_custom_call.1} parent=31 // pred_region
          %p184 = scmp.lt.s32.totalorder %s14, 1
          %s185 = scalar_select %p184, %s14, 1
          %s186 = smul.addr %s185, 4
          %s187 = scalar_lea.vmem %s0, %s186
        $region36: #{tpu_custom_call.1} parent=31 // pred_fallthru
          _
      $region32: #{tpu_custom_call.1} parent=5 // pred_fallthru
        _
      %p188 = scmp.le.s32.totalorder 1, %s14
      %p189 = scmp.lt.s32.totalorder %s14, 3
      %p190 = pnand %p188, %p189
      %p191 = pneg %p190
      // Predicated region
      $region37: #{tpu_custom_call.1} parent=5 // pred_check
        _
      $region38: #{tpu_custom_call.1} parent=5 // pred_check_branch
        %193 = sbr.rel (%p190) target = $region40
      $region39: #{tpu_custom_call.1} parent=5 // pred_region
        %s194 = ssub.s32 %s14, 1
        %p195 = scmp.lt.s32.totalorder %s19, 1
        %s196 = scalar_select %p195, %s19, 1
        %s197 = smul.addr %s196, 4
        %s198 = scalar_lea.vmem %s0, %s197
        %p199 = pneg %p40
        %p200 = pneg %p37
        %p201 = pneg %p61
        %p202 = pneg %p58
        %p203 = pneg %p82
        %p204 = pneg %p79
        %p205 = pneg %p103
        %p206 = pneg %p100
        %p207 = pneg %p124
        %p208 = pneg %p121
        %p209 = pneg %p150
        %p210 = pneg %p147
        %s211 = sand.u32 %s137, 1
        %s212 = scalar_lea.sflag [#allocation5], %s211
        %s213 = sand.u32 %s137, 1
        %s214 = smul.addr %s213, 8
        %s215 = scalar_lea.vmem [#allocation4], %s214
        %p216 = scmp.lt.s32.totalorder %s19, 1
        %s217 = scalar_select %p216, %s19, 1
        %s218 = smul.addr %s217, 4
        %s219 = scalar_lea.vmem %s0, %s218
        %vm220 = vcmask 11264
        %221 = vst.msk [vmem:[#allocation2] sm:$0xf] %vm220, 0.0
        %v222 = vld [vmem:[%s219] sm:$0xf]
        %224 = vrot.lane.b32.xlu0 %v222, 2
        %v225 = vpop.permute.xlu0 %224
        %vm227 = vcmask 142352
        %228 = vst.msk [vmem:[#allocation2] sm:$0xf] %vm227, %v225
        %vm229 = vcmask 158864
        %230 = vst.msk [vmem:[#allocation2] sm:$0xf] %vm229, 0.0
        %v231 = vld [vmem:[#allocation2] sm:$0xf]
        %v232 = vld [vmem:[%s1] sm:$0xff]
        %s233 = scalar_lea.vmem %s1, 8
        %v234 = vld [vmem:[%s233] sm:$0xff]
        %236 = vrot.lane.b32.xlu0 %v231, 127
        %v237 = vpop.permute.xlu0 %236
        %vm238 = vcmask 31744
        %v240 = vsel %vm238, %v234, 0
        %vm242 = vcmask 1043456
        %v243 = vsel %vm242, %v237, 0
        %245 = vmatprep.subr.mxu0 0.0
        %246 = vmatpush1.msra.mxu0 %v243
        %247 = vmatprep.subr.mxu0 0.0
        %248 = vmatpush1.msra.mxu0 0.0
        %249 = vmatprep.subr.mxu0 0.0
        %250 = vmatpush1.msra.mxu0 0.0
        %251 = vmatprep.subr.mxu0 0.0
        %252 = vmatpush1.msra.mxu0 0.0
        %253 = vmatprep.subr.mxu0 0.0
        %254 = vmatpush1.msra.mxu0 0.0
        %255 = vmatprep.subr.mxu0 0.0
        %256 = vmatpush1.msra.mxu0 0.0
        %257 = vmatprep.subr.mxu0 0.0
        %258 = vmatpush1.msra.mxu0 0.0
        %259 = vmatprep.subr.mxu0 0.0
        %260 = vmatpush1.msra.mxu0 0.0
        %261 = vmatprep.subr.mxu0 0.0
        %262 = vmatpush1.msra.mxu0 0.0
        %263 = vmatprep.subr.mxu0 0.0
        %264 = vmatpush1.msra.mxu0 0.0
        %265 = vmatprep.subr.mxu0 0.0
        %266 = vmatpush1.msra.mxu0 0.0
        %267 = vmatprep.subr.mxu0 0.0
        %268 = vmatpush1.msra.mxu0 0.0
        %269 = vmatprep.subr.mxu0 0.0
        %270 = vmatpush1.msra.mxu0 0.0
        %271 = vmatprep.subr.mxu0 0.0
        %272 = vmatpush1.msra.mxu0 0.0
        %273 = vmatprep.subr.mxu0 0.0
        %274 = vmatpush1.msra.mxu0 0.0
        %275 = vmatprep.subr.mxu0 0.0
        %276 = vmatpush1.msra.mxu0 0.0
        %277 = vmatprep.subr.mxu0 0.0
        %278 = vmatpush1.msra.mxu0 0.0
        %279 = vmatprep.subr.mxu0 0.0
        %280 = vmatpush1.msra.mxu0 0.0
        %281 = vmatprep.subr.mxu0 0.0
        %282 = vmatpush1.msra.mxu0 0.0
        %283 = vmatprep.subr.mxu0 0.0
        %284 = vmatpush1.msra.mxu0 0.0
        %285 = vmatprep.subr.mxu0 0.0
        %286 = vmatpush1.msra.mxu0 0.0
        %287 = vmatprep.subr.mxu0 0.0
        %288 = vmatpush1.msra.mxu0 0.0
        %289 = vmatprep.subr.mxu0 0.0
        %290 = vmatpush1.msra.mxu0 0.0
        %291 = vmatprep.subr.mxu0 0.0
        %292 = vmatpush1.msra.mxu0 0.0
        %293 = vmatprep.subr.mxu0 0.0
        %294 = vmatpush1.msra.mxu0 0.0
        %295 = vmatprep.subr.mxu0 0.0
        %296 = vmatpush1.msra.mxu0 0.0
        %297 = vmatprep.subr.mxu0 0.0
        %298 = vmatpush1.msra.mxu0 0.0
        %299 = vmatprep.subr.mxu0 0.0
        %300 = vmatpush1.msra.mxu0 0.0
        %301 = vmatprep.subr.mxu0 0.0
        %302 = vmatpush1.msra.mxu0 0.0
        %303 = vmatprep.subr.mxu0 0.0
        %304 = vmatpush1.msra.mxu0 0.0
        %305 = vmatprep.subr.mxu0 0.0
        %306 = vmatpush1.msra.mxu0 0.0
        %307 = vmatprep.subr.mxu0 0.0
        %308 = vmatpush1.msra.mxu0 0.0
        %309 = vmatprep.mubr.f32.mxu0 0.0
        %310 = vmatmul.mubr.f32.gmra.mrb[0].mxu0 %v240
        %v311 = vpop.f32.mrb[0].mxu0
        %v312 = vadd.f32 0.0, %v311
        %v313 = vpop.f32.mrb[0].mxu0
        %314 = vdwg.mxu0
        %v316 = vsel %vm238, %v232, 0
        %v318 = vsel %vm242, %v231, 0
        %320 = vmatprep.subr.mxu0 0.0
        %321 = vmatpush1.msra.mxu0 %v318
        %322 = vmatprep.subr.mxu0 0.0
        %323 = vmatpush1.msra.mxu0 0.0
        %324 = vmatprep.subr.mxu0 0.0
        %325 = vmatpush1.msra.mxu0 0.0
        %326 = vmatprep.subr.mxu0 0.0
        %327 = vmatpush1.msra.mxu0 0.0
        %328 = vmatprep.subr.mxu0 0.0
        %329 = vmatpush1.msra.mxu0 0.0
        %330 = vmatprep.subr.mxu0 0.0
        %331 = vmatpush1.msra.mxu0 0.0
        %332 = vmatprep.subr.mxu0 0.0
        %333 = vmatpush1.msra.mxu0 0.0
        %334 = vmatprep.subr.mxu0 0.0
        %335 = vmatpush1.msra.mxu0 0.0
        %336 = vmatprep.subr.mxu0 0.0
        %337 = vmatpush1.msra.mxu0 0.0
        %338 = vmatprep.subr.mxu0 0.0
        %339 = vmatpush1.msra.mxu0 0.0
        %340 = vmatprep.subr.mxu0 0.0
        %341 = vmatpush1.msra.mxu0 0.0
        %342 = vmatprep.subr.mxu0 0.0
        %343 = vmatpush1.msra.mxu0 0.0
        %344 = vmatprep.subr.mxu0 0.0
        %345 = vmatpush1.msra.mxu0 0.0
        %346 = vmatprep.subr.mxu0 0.0
        %347 = vmatpush1.msra.mxu0 0.0
        %348 = vmatprep.subr.mxu0 0.0
        %349 = vmatpush1.msra.mxu0 0.0
        %350 = vmatprep.subr.mxu0 0.0
        %351 = vmatpush1.msra.mxu0 0.0
        %352 = vmatprep.subr.mxu0 0.0
        %353 = vmatpush1.msra.mxu0 0.0
        %354 = vmatprep.subr.mxu0 0.0
        %355 = vmatpush1.msra.mxu0 0.0
        %356 = vmatprep.subr.mxu0 0.0
        %357 = vmatpush1.msra.mxu0 0.0
        %358 = vmatprep.subr.mxu0 0.0
        %359 = vmatpush1.msra.mxu0 0.0
        %360 = vmatprep.subr.mxu0 0.0
        %361 = vmatpush1.msra.mxu0 0.0
        %362 = vmatprep.subr.mxu0 0.0
        %363 = vmatpush1.msra.mxu0 0.0
        %364 = vmatprep.subr.mxu0 0.0
        %365 = vmatpush1.msra.mxu0 0.0
        %366 = vmatprep.subr.mxu0 0.0
        %367 = vmatpush1.msra.mxu0 0.0
        %368 = vmatprep.subr.mxu0 0.0
        %369 = vmatpush1.msra.mxu0 0.0
        %370 = vmatprep.subr.mxu0 0.0
        %371 = vmatpush1.msra.mxu0 0.0
        %372 = vmatprep.subr.mxu0 0.0
        %373 = vmatpush1.msra.mxu0 0.0
        %374 = vmatprep.subr.mxu0 0.0
        %375 = vmatpush1.msra.mxu0 0.0
        %376 = vmatprep.subr.mxu0 0.0
        %377 = vmatpush1.msra.mxu0 0.0
        %378 = vmatprep.subr.mxu0 0.0
        %379 = vmatpush1.msra.mxu0 0.0
        %380 = vmatprep.subr.mxu0 0.0
        %381 = vmatpush1.msra.mxu0 0.0
        %382 = vmatprep.subr.mxu0 0.0
        %383 = vmatpush1.msra.mxu0 0.0
        %384 = vmatprep.mubr.f32.mxu0 0.0
        %385 = vmatmul.mubr.f32.gmra.mrb[0].mxu0 %v316
        %v386 = vpop.f32.mrb[0].mxu0
        %v387 = vadd.f32 %v312, %v386
        %v388 = vpop.f32.mrb[0].mxu0
        %389 = vdwg.mxu0
        %s390 = scalar_lea.vmem %s1, 16
        %v391 = vld [vmem:[%s390] sm:$0xff]
        %392 = vrot.lane.b32.xlu0 %v231, 126
        %v393 = vpop.permute.xlu0 %392
        %v395 = vsel %vm238, %v391, 0
        %v397 = vsel %vm242, %v393, 0
        %399 = vmatprep.subr.mxu0 0.0
        %400 = vmatpush1.msra.mxu0 %v397
        %401 = vmatprep.subr.mxu0 0.0
        %402 = vmatpush1.msra.mxu0 0.0
        %403 = vmatprep.subr.mxu0 0.0
        %404 = vmatpush1.msra.mxu0 0.0
        %405 = vmatprep.subr.mxu0 0.0
        %406 = vmatpush1.msra.mxu0 0.0
        %407 = vmatprep.subr.mxu0 0.0
        %408 = vmatpush1.msra.mxu0 0.0
        %409 = vmatprep.subr.mxu0 0.0
        %410 = vmatpush1.msra.mxu0 0.0
        %411 = vmatprep.subr.mxu0 0.0
        %412 = vmatpush1.msra.mxu0 0.0
        %413 = vmatprep.subr.mxu0 0.0
        %414 = vmatpush1.msra.mxu0 0.0
        %415 = vmatprep.subr.mxu0 0.0
        %416 = vmatpush1.msra.mxu0 0.0
        %417 = vmatprep.subr.mxu0 0.0
        %418 = vmatpush1.msra.mxu0 0.0
        %419 = vmatprep.subr.mxu0 0.0
        %420 = vmatpush1.msra.mxu0 0.0
        %421 = vmatprep.subr.mxu0 0.0
        %422 = vmatpush1.msra.mxu0 0.0
        %423 = vmatprep.subr.mxu0 0.0
        %424 = vmatpush1.msra.mxu0 0.0
        %425 = vmatprep.subr.mxu0 0.0
        %426 = vmatpush1.msra.mxu0 0.0
        %427 = vmatprep.subr.mxu0 0.0
        %428 = vmatpush1.msra.mxu0 0.0
        %429 = vmatprep.subr.mxu0 0.0
        %430 = vmatpush1.msra.mxu0 0.0
        %431 = vmatprep.subr.mxu0 0.0
        %432 = vmatpush1.msra.mxu0 0.0
        %433 = vmatprep.subr.mxu0 0.0
        %434 = vmatpush1.msra.mxu0 0.0
        %435 = vmatprep.subr.mxu0 0.0
        %436 = vmatpush1.msra.mxu0 0.0
        %437 = vmatprep.subr.mxu0 0.0
        %438 = vmatpush1.msra.mxu0 0.0
        %439 = vmatprep.subr.mxu0 0.0
        %440 = vmatpush1.msra.mxu0 0.0
        %441 = vmatprep.subr.mxu0 0.0
        %442 = vmatpush1.msra.mxu0 0.0
        %443 = vmatprep.subr.mxu0 0.0
        %444 = vmatpush1.msra.mxu0 0.0
        %445 = vmatprep.subr.mxu0 0.0
        %446 = vmatpush1.msra.mxu0 0.0
        %447 = vmatprep.subr.mxu0 0.0
        %448 = vmatpush1.msra.mxu0 0.0
        %449 = vmatprep.subr.mxu0 0.0
        %450 = vmatpush1.msra.mxu0 0.0
        %451 = vmatprep.subr.mxu0 0.0
        %452 = vmatpush1.msra.mxu0 0.0
        %453 = vmatprep.subr.mxu0 0.0
        %454 = vmatpush1.msra.mxu0 0.0
        %455 = vmatprep.subr.mxu0 0.0
        %456 = vmatpush1.msra.mxu0 0.0
        %457 = vmatprep.subr.mxu0 0.0
        %458 = vmatpush1.msra.mxu0 0.0
        %459 = vmatprep.subr.mxu0 0.0
        %460 = vmatpush1.msra.mxu0 0.0
        %461 = vmatprep.subr.mxu0 0.0
        %462 = vmatpush1.msra.mxu0 0.0
        %463 = vmatprep.mubr.f32.mxu0 0.0
        %464 = vmatmul.mubr.f32.gmra.mrb[0].mxu0 %v395
        %v465 = vpop.f32.mrb[0].mxu0
        %v466 = vadd.f32 0.0, %v465
        %v467 = vpop.f32.mrb[0].mxu0
        %468 = vdwg.mxu0
        %v469 = vadd.f32 %v387, %v466
        %s470 = scalar_lea.vmem %s1, 24
        %v471 = vld [vmem:[%s470] sm:$0xff]
        %472 = vrot.lane.b32.xlu0 %v231, 125
        %v473 = vpop.permute.xlu0 %472
        %v475 = vsel %vm238, %v471, 0
        %v477 = vsel %vm242, %v473, 0
        %479 = vmatprep.subr.mxu0 0.0
        %480 = vmatpush1.msra.mxu0 %v477
        %481 = vmatprep.subr.mxu0 0.0
        %482 = vmatpush1.msra.mxu0 0.0
        %483 = vmatprep.subr.mxu0 0.0
        %484 = vmatpush1.msra.mxu0 0.0
        %485 = vmatprep.subr.mxu0 0.0
        %486 = vmatpush1.msra.mxu0 0.0
        %487 = vmatprep.subr.mxu0 0.0
        %488 = vmatpush1.msra.mxu0 0.0
        %489 = vmatprep.subr.mxu0 0.0
        %490 = vmatpush1.msra.mxu0 0.0
        %491 = vmatprep.subr.mxu0 0.0
        %492 = vmatpush1.msra.mxu0 0.0
        %493 = vmatprep.subr.mxu0 0.0
        %494 = vmatpush1.msra.mxu0 0.0
        %495 = vmatprep.subr.mxu0 0.0
        %496 = vmatpush1.msra.mxu0 0.0
        %497 = vmatprep.subr.mxu0 0.0
        %498 = vmatpush1.msra.mxu0 0.0
        %499 = vmatprep.subr.mxu0 0.0
        %500 = vmatpush1.msra.mxu0 0.0
        %501 = vmatprep.subr.mxu0 0.0
        %502 = vmatpush1.msra.mxu0 0.0
        %503 = vmatprep.subr.mxu0 0.0
        %504 = vmatpush1.msra.mxu0 0.0
        %505 = vmatprep.subr.mxu0 0.0
        %506 = vmatpush1.msra.mxu0 0.0
        %507 = vmatprep.subr.mxu0 0.0
        %508 = vmatpush1.msra.mxu0 0.0
        %509 = vmatprep.subr.mxu0 0.0
        %510 = vmatpush1.msra.mxu0 0.0
        %511 = vmatprep.subr.mxu0 0.0
        %512 = vmatpush1.msra.mxu0 0.0
        %513 = vmatprep.subr.mxu0 0.0
        %514 = vmatpush1.msra.mxu0 0.0
        %515 = vmatprep.subr.mxu0 0.0
        %516 = vmatpush1.msra.mxu0 0.0
        %517 = vmatprep.subr.mxu0 0.0
        %518 = vmatpush1.msra.mxu0 0.0
        %519 = vmatprep.subr.mxu0 0.0
        %520 = vmatpush1.msra.mxu0 0.0
        %521 = vmatprep.subr.mxu0 0.0
        %522 = vmatpush1.msra.mxu0 0.0
        %523 = vmatprep.subr.mxu0 0.0
        %524 = vmatpush1.msra.mxu0 0.0
        %525 = vmatprep.subr.mxu0 0.0
        %526 = vmatpush1.msra.mxu0 0.0
        %527 = vmatprep.subr.mxu0 0.0
        %528 = vmatpush1.msra.mxu0 0.0
        %529 = vmatprep.subr.mxu0 0.0
        %530 = vmatpush1.msra.mxu0 0.0
        %531 = vmatprep.subr.mxu0 0.0
        %532 = vmatpush1.msra.mxu0 0.0
        %533 = vmatprep.subr.mxu0 0.0
        %534 = vmatpush1.msra.mxu0 0.0
        %535 = vmatprep.subr.mxu0 0.0
        %536 = vmatpush1.msra.mxu0 0.0
        %537 = vmatprep.subr.mxu0 0.0
        %538 = vmatpush1.msra.mxu0 0.0
        %539 = vmatprep.subr.mxu0 0.0
        %540 = vmatpush1.msra.mxu0 0.0
        %541 = vmatprep.subr.mxu0 0.0
        %542 = vmatpush1.msra.mxu0 0.0
        %543 = vmatprep.mubr.f32.mxu0 0.0
        %544 = vmatmul.mubr.f32.gmra.mrb[0].mxu0 %v475
        %v545 = vpop.f32.mrb[0].mxu0
        %v546 = vadd.f32 0.0, %v545
        %v547 = vpop.f32.mrb[0].mxu0
        %548 = vdwg.mxu0
        %v549 = vadd.f32 %v469, %v546
        %s550 = scalar_lea.vmem %s1, 32
        %v551 = vld [vmem:[%s550] sm:$0xff]
        %552 = vrot.lane.b32.xlu0 %v231, 124
        %v553 = vpop.permute.xlu0 %552
        %v555 = vsel %vm238, %v551, 0
        %v557 = vsel %vm242, %v553, 0
        %559 = vmatprep.subr.mxu0 0.0
        %560 = vmatpush1.msra.mxu0 %v557
        %561 = vmatprep.subr.mxu0 0.0
        %562 = vmatpush1.msra.mxu0 0.0
        %563 = vmatprep.subr.mxu0 0.0
        %564 = vmatpush1.msra.mxu0 0.0
        %565 = vmatprep.subr.mxu0 0.0
        %566 = vmatpush1.msra.mxu0 0.0
        %567 = vmatprep.subr.mxu0 0.0
        %568 = vmatpush1.msra.mxu0 0.0
        %569 = vmatprep.subr.mxu0 0.0
        %570 = vmatpush1.msra.mxu0 0.0
        %571 = vmatprep.subr.mxu0 0.0
        %572 = vmatpush1.msra.mxu0 0.0
        %573 = vmatprep.subr.mxu0 0.0
        %574 = vmatpush1.msra.mxu0 0.0
        %575 = vmatprep.subr.mxu0 0.0
        %576 = vmatpush1.msra.mxu0 0.0
        %577 = vmatprep.subr.mxu0 0.0
        %578 = vmatpush1.msra.mxu0 0.0
        %579 = vmatprep.subr.mxu0 0.0
        %580 = vmatpush1.msra.mxu0 0.0
        %581 = vmatprep.subr.mxu0 0.0
        %582 = vmatpush1.msra.mxu0 0.0
        %583 = vmatprep.subr.mxu0 0.0
        %584 = vmatpush1.msra.mxu0 0.0
        %585 = vmatprep.subr.mxu0 0.0
        %586 = vmatpush1.msra.mxu0 0.0
        %587 = vmatprep.subr.mxu0 0.0
        %588 = vmatpush1.msra.mxu0 0.0
        %589 = vmatprep.subr.mxu0 0.0
        %590 = vmatpush1.msra.mxu0 0.0
        %591 = vmatprep.subr.mxu0 0.0
        %592 = vmatpush1.msra.mxu0 0.0
        %593 = vmatprep.subr.mxu0 0.0
        %594 = vmatpush1.msra.mxu0 0.0
        %595 = vmatprep.subr.mxu0 0.0
        %596 = vmatpush1.msra.mxu0 0.0
        %597 = vmatprep.subr.mxu0 0.0
        %598 = vmatpush1.msra.mxu0 0.0
        %599 = vmatprep.subr.mxu0 0.0
        %600 = vmatpush1.msra.mxu0 0.0
        %601 = vmatprep.subr.mxu0 0.0
        %602 = vmatpush1.msra.mxu0 0.0
        %603 = vmatprep.subr.mxu0 0.0
        %604 = vmatpush1.msra.mxu0 0.0
        %605 = vmatprep.subr.mxu0 0.0
        %606 = vmatpush1.msra.mxu0 0.0
        %607 = vmatprep.subr.mxu0 0.0
        %608 = vmatpush1.msra.mxu0 0.0
        %609 = vmatprep.subr.mxu0 0.0
        %610 = vmatpush1.msra.mxu0 0.0
        %611 = vmatprep.subr.mxu0 0.0
        %612 = vmatpush1.msra.mxu0 0.0
        %613 = vmatprep.subr.mxu0 0.0
        %614 = vmatpush1.msra.mxu0 0.0
        %615 = vmatprep.subr.mxu0 0.0
        %616 = vmatpush1.msra.mxu0 0.0
        %617 = vmatprep.subr.mxu0 0.0
        %618 = vmatpush1.msra.mxu0 0.0
        %619 = vmatprep.subr.mxu0 0.0
        %620 = vmatpush1.msra.mxu0 0.0
        %621 = vmatprep.subr.mxu0 0.0
        %622 = vmatpush1.msra.mxu0 0.0
        %623 = vmatprep.mubr.f32.mxu0 0.0
        %624 = vmatmul.mubr.f32.gmra.mrb[0].mxu0 %v555
        %v625 = vpop.f32.mrb[0].mxu0
        %v626 = vadd.f32 0.0, %v625
        %v627 = vpop.f32.mrb[0].mxu0
        %628 = vdwg.mxu0
        %v629 = vadd.f32 %v549, %v626
        %v630 = vld [vmem:[%s2] sm:$0xff]
        %632 = vset.pattern.permute.xlu0 0
        %633 = vperm.xlu0 %632, %v630
        %v634 = vpop.permute.xlu0 %633
        %v636 = vadd.f32 %v629, %v634
        %vm637 = vcmask 7168
        %638 = vst.msk [vmem:[#allocation3] sm:$0xff] %vm637, 0.0
        %640 = vrot.lane.b32.xlu0 %v636, 1
        %v641 = vpop.permute.xlu0 %640
        %vm643 = vcmask 138248
        %644 = vst.msk [vmem:[#allocation3] sm:$0xff] %vm643, %v641
        %vm645 = vcmask 146568
        %646 = vst.msk [vmem:[#allocation3] sm:$0xff] %vm645, 0.0
        %v647 = vld [vmem:[%s4] sm:$0xff]
        %v648 = vld [vmem:[%s3] sm:$0xff]
        %v649 = vld [vmem:[#allocation3] sm:$0xff]
        %vm650 = vcmask 64512
        %v652 = vsel %vm650, %v648, 0
        %654 = vmatprep.subr.mxu0 0.0
        %655 = vmatpush1.msra.mxu0 %v649
        %656 = vmatprep.subr.mxu0 0.0
        %657 = vmatpush1.msra.mxu0 0.0
        %658 = vmatprep.subr.mxu0 0.0
        %659 = vmatpush1.msra.mxu0 0.0
        %660 = vmatprep.subr.mxu0 0.0
        %661 = vmatpush1.msra.mxu0 0.0
        %662 = vmatprep.subr.mxu0 0.0
        %663 = vmatpush1.msra.mxu0 0.0
        %664 = vmatprep.subr.mxu0 0.0
        %665 = vmatpush1.msra.mxu0 0.0
        %666 = vmatprep.subr.mxu0 0.0
        %667 = vmatpush1.msra.mxu0 0.0
        %668 = vmatprep.subr.mxu0 0.0
        %669 = vmatpush1.msra.mxu0 0.0
        %670 = vmatprep.subr.mxu0 0.0
        %671 = vmatpush1.msra.mxu0 0.0
        %672 = vmatprep.subr.mxu0 0.0
        %673 = vmatpush1.msra.mxu0 0.0
        %674 = vmatprep.subr.mxu0 0.0
        %675 = vmatpush1.msra.mxu0 0.0
        %676 = vmatprep.subr.mxu0 0.0
        %677 = vmatpush1.msra.mxu0 0.0
        %678 = vmatprep.subr.mxu0 0.0
        %679 = vmatpush1.msra.mxu0 0.0
        %680 = vmatprep.subr.mxu0 0.0
        %681 = vmatpush1.msra.mxu0 0.0
        %682 = vmatprep.subr.mxu0 0.0
        %683 = vmatpush1.msra.mxu0 0.0
        %684 = vmatprep.subr.mxu0 0.0
        %685 = vmatpush1.msra.mxu0 0.0
        %686 = vmatprep.subr.mxu0 0.0
        %687 = vmatpush1.msra.mxu0 0.0
        %688 = vmatprep.subr.mxu0 0.0
        %689 = vmatpush1.msra.mxu0 0.0
        %690 = vmatprep.subr.mxu0 0.0
        %691 = vmatpush1.msra.mxu0 0.0
        %692 = vmatprep.subr.mxu0 0.0
        %693 = vmatpush1.msra.mxu0 0.0
        %694 = vmatprep.subr.mxu0 0.0
        %695 = vmatpush1.msra.mxu0 0.0
        %696 = vmatprep.subr.mxu0 0.0
        %697 = vmatpush1.msra.mxu0 0.0
        %698 = vmatprep.subr.mxu0 0.0
        %699 = vmatpush1.msra.mxu0 0.0
        %700 = vmatprep.subr.mxu0 0.0
        %701 = vmatpush1.msra.mxu0 0.0
        %702 = vmatprep.subr.mxu0 0.0
        %703 = vmatpush1.msra.mxu0 0.0
        %704 = vmatprep.subr.mxu0 0.0
        %705 = vmatpush1.msra.mxu0 0.0
        %706 = vmatprep.subr.mxu0 0.0
        %707 = vmatpush1.msra.mxu0 0.0
        %708 = vmatprep.subr.mxu0 0.0
        %709 = vmatpush1.msra.mxu0 0.0
        %710 = vmatprep.subr.mxu0 0.0
        %711 = vmatpush1.msra.mxu0 0.0
        %712 = vmatprep.subr.mxu0 0.0
        %713 = vmatpush1.msra.mxu0 0.0
        %714 = vmatprep.subr.mxu0 0.0
        %715 = vmatpush1.msra.mxu0 0.0
        %716 = vmatprep.subr.mxu0 0.0
        %717 = vmatpush1.msra.mxu0 0.0
        %718 = vmatprep.mubr.f32.mxu0 0.0
        %719 = vmatmul.mubr.f32.gmra.mrb[0].mxu0 %v652
        %v720 = vpop.f32.mrb[0].mxu0
        %v721 = vadd.f32 0.0, %v720
        %v722 = vpop.f32.mrb[0].mxu0
        %723 = vdwg.mxu0
        %725 = vset.pattern.permute.xlu0 0
        %726 = vperm.xlu0 %725, %v647
        %v727 = vpop.permute.xlu0 %726
        %v729 = vadd.f32 %v727, %v721
        %s730 = scalar_lea.vmem %s3, 8
        %v731 = vld [vmem:[%s730] sm:$0xff]
        %733 = vrot.lane.b32.xlu0 %v649, 127
        %v734 = vpop.permute.xlu0 %733
        %v737 = vsel %vm650, %v731, 0
        %739 = vmatprep.subr.mxu0 0.0
        %740 = vmatpush1.msra.mxu0 %v734
        %741 = vmatprep.subr.mxu0 0.0
        %742 = vmatpush1.msra.mxu0 0.0
        %743 = vmatprep.subr.mxu0 0.0
        %744 = vmatpush1.msra.mxu0 0.0
        %745 = vmatprep.subr.mxu0 0.0
        %746 = vmatpush1.msra.mxu0 0.0
        %747 = vmatprep.subr.mxu0 0.0
        %748 = vmatpush1.msra.mxu0 0.0
        %749 = vmatprep.subr.mxu0 0.0
        %750 = vmatpush1.msra.mxu0 0.0
        %751 = vmatprep.subr.mxu0 0.0
        %752 = vmatpush1.msra.mxu0 0.0
        %753 = vmatprep.subr.mxu0 0.0
        %754 = vmatpush1.msra.mxu0 0.0
        %755 = vmatprep.subr.mxu0 0.0
        %756 = vmatpush1.msra.mxu0 0.0
        %757 = vmatprep.subr.mxu0 0.0
        %758 = vmatpush1.msra.mxu0 0.0
        %759 = vmatprep.subr.mxu0 0.0
        %760 = vmatpush1.msra.mxu0 0.0
        %761 = vmatprep.subr.mxu0 0.0
        %762 = vmatpush1.msra.mxu0 0.0
        %763 = vmatprep.subr.mxu0 0.0
        %764 = vmatpush1.msra.mxu0 0.0
        %765 = vmatprep.subr.mxu0 0.0
        %766 = vmatpush1.msra.mxu0 0.0
        %767 = vmatprep.subr.mxu0 0.0
        %768 = vmatpush1.msra.mxu0 0.0
        %769 = vmatprep.subr.mxu0 0.0
        %770 = vmatpush1.msra.mxu0 0.0
        %771 = vmatprep.subr.mxu0 0.0
        %772 = vmatpush1.msra.mxu0 0.0
        %773 = vmatprep.subr.mxu0 0.0
        %774 = vmatpush1.msra.mxu0 0.0
        %775 = vmatprep.subr.mxu0 0.0
        %776 = vmatpush1.msra.mxu0 0.0
        %777 = vmatprep.subr.mxu0 0.0
        %778 = vmatpush1.msra.mxu0 0.0
        %779 = vmatprep.subr.mxu0 0.0
        %780 = vmatpush1.msra.mxu0 0.0
        %781 = vmatprep.subr.mxu0 0.0
        %782 = vmatpush1.msra.mxu0 0.0
        %783 = vmatprep.subr.mxu0 0.0
        %784 = vmatpush1.msra.mxu0 0.0
        %785 = vmatprep.subr.mxu0 0.0
        %786 = vmatpush1.msra.mxu0 0.0
        %787 = vmatprep.subr.mxu0 0.0
        %788 = vmatpush1.msra.mxu0 0.0
        %789 = vmatprep.subr.mxu0 0.0
        %790 = vmatpush1.msra.mxu0 0.0
        %791 = vmatprep.subr.mxu0 0.0
        %792 = vmatpush1.msra.mxu0 0.0
        %793 = vmatprep.subr.mxu0 0.0
        %794 = vmatpush1.msra.mxu0 0.0
        %795 = vmatprep.subr.mxu0 0.0
        %796 = vmatpush1.msra.mxu0 0.0
        %797 = vmatprep.subr.mxu0 0.0
        %798 = vmatpush1.msra.mxu0 0.0
        %799 = vmatprep.subr.mxu0 0.0
        %800 = vmatpush1.msra.mxu0 0.0
        %801 = vmatprep.subr.mxu0 0.0
        %802 = vmatpush1.msra.mxu0 0.0
        %803 = vmatprep.mubr.f32.mxu0 0.0
        %804 = vmatmul.mubr.f32.gmra.mrb[0].mxu0 %v737
        %v805 = vpop.f32.mrb[0].mxu0
        %v806 = vadd.f32 0.0, %v805
        %v807 = vpop.f32.mrb[0].mxu0
        %808 = vdwg.mxu0
        %v809 = vadd.f32 %v729, %v806
        %s810 = scalar_lea.vmem %s3, 16
        %v811 = vld [vmem:[%s810] sm:$0xff]
        %812 = vrot.lane.b32.xlu0 %v649, 126
        %v813 = vpop.permute.xlu0 %812
        %v816 = vsel %vm650, %v811, 0
        %818 = vmatprep.subr.mxu0 0.0
        %819 = vmatpush1.msra.mxu0 %v813
        %820 = vmatprep.subr.mxu0 0.0
        %821 = vmatpush1.msra.mxu0 0.0
        %822 = vmatprep.subr.mxu0 0.0
        %823 = vmatpush1.msra.mxu0 0.0
        %824 = vmatprep.subr.mxu0 0.0
        %825 = vmatpush1.msra.mxu0 0.0
        %826 = vmatprep.subr.mxu0 0.0
        %827 = vmatpush1.msra.mxu0 0.0
        %828 = vmatprep.subr.mxu0 0.0
        %829 = vmatpush1.msra.mxu0 0.0
        %830 = vmatprep.subr.mxu0 0.0
        %831 = vmatpush1.msra.mxu0 0.0
        %832 = vmatprep.subr.mxu0 0.0
        %833 = vmatpush1.msra.mxu0 0.0
        %834 = vmatprep.subr.mxu0 0.0
        %835 = vmatpush1.msra.mxu0 0.0
        %836 = vmatprep.subr.mxu0 0.0
        %837 = vmatpush1.msra.mxu0 0.0
        %838 = vmatprep.subr.mxu0 0.0
        %839 = vmatpush1.msra.mxu0 0.0
        %840 = vmatprep.subr.mxu0 0.0
        %841 = vmatpush1.msra.mxu0 0.0
        %842 = vmatprep.subr.mxu0 0.0
        %843 = vmatpush1.msra.mxu0 0.0
        %844 = vmatprep.subr.mxu0 0.0
        %845 = vmatpush1.msra.mxu0 0.0
        %846 = vmatprep.subr.mxu0 0.0
        %847 = vmatpush1.msra.mxu0 0.0
        %848 = vmatprep.subr.mxu0 0.0
        %849 = vmatpush1.msra.mxu0 0.0
        %850 = vmatprep.subr.mxu0 0.0
        %851 = vmatpush1.msra.mxu0 0.0
        %852 = vmatprep.subr.mxu0 0.0
        %853 = vmatpush1.msra.mxu0 0.0
        %854 = vmatprep.subr.mxu0 0.0
        %855 = vmatpush1.msra.mxu0 0.0
        %856 = vmatprep.subr.mxu0 0.0
        %857 = vmatpush1.msra.mxu0 0.0
        %858 = vmatprep.subr.mxu0 0.0
        %859 = vmatpush1.msra.mxu0 0.0
        %860 = vmatprep.subr.mxu0 0.0
        %861 = vmatpush1.msra.mxu0 0.0
        %862 = vmatprep.subr.mxu0 0.0
        %863 = vmatpush1.msra.mxu0 0.0
        %864 = vmatprep.subr.mxu0 0.0
        %865 = vmatpush1.msra.mxu0 0.0
        %866 = vmatprep.subr.mxu0 0.0
        %867 = vmatpush1.msra.mxu0 0.0
        %868 = vmatprep.subr.mxu0 0.0
        %869 = vmatpush1.msra.mxu0 0.0
        %870 = vmatprep.subr.mxu0 0.0
        %871 = vmatpush1.msra.mxu0 0.0
        %872 = vmatprep.subr.mxu0 0.0
        %873 = vmatpush1.msra.mxu0 0.0
        %874 = vmatprep.subr.mxu0 0.0
        %875 = vmatpush1.msra.mxu0 0.0
        %876 = vmatprep.subr.mxu0 0.0
        %877 = vmatpush1.msra.mxu0 0.0
        %878 = vmatprep.subr.mxu0 0.0
        %879 = vmatpush1.msra.mxu0 0.0
        %880 = vmatprep.subr.mxu0 0.0
        %881 = vmatpush1.msra.mxu0 0.0
        %882 = vmatprep.mubr.f32.mxu0 0.0
        %883 = vmatmul.mubr.f32.gmra.mrb[0].mxu0 %v816
        %v884 = vpop.f32.mrb[0].mxu0
        %v885 = vadd.f32 0.0, %v884
        %v886 = vpop.f32.mrb[0].mxu0
        %887 = vdwg.mxu0
        %v888 = vadd.f32 %v809, %v885
        %vm889 = vcmp.ge.f32.partialorder %v888, 0.0
        %v890 = vmul.f32 %v888, 0.1
        %v891 = vsel %vm889, %v888, %v890
        %vm892 = vcmask 130048
        %893 = vst.msk [vmem:[%s215] sm:$0xff] %vm892, %v891
        %s894 = sand.u32 %s137, 1
        %s895 = scalar_lea.sflag [#allocation5], %s894
        %s896 = sand.u32 %s137, 1
        %s897 = smul.addr %s896, 8
        %s898 = scalar_lea.vmem [#allocation4], %s897
        // Predicated region
        $region41: #{tpu_custom_call.1} parent=39 // pred_check
          %p899 = pneg %p147
        $region42: #{tpu_custom_call.1} parent=39 // pred_check_branch
          %901 = sbr.rel (%p899) target = $region44
        $region43: #{tpu_custom_call.1} parent=39 // pred_region
          %s903 = ssub.s32 128, 128
          %904 = vsyncadd %s895, %s903
          %s905 = smul.addr %s19, 128
          %s906 = scalar_lea.hbm %s5, %s905
          %s908 = sshll.u32 %s898, 4
          %s909 = int_to_ptr.vmem [resolvable:$true] %s908
          %911 = dma.vmem_to_hbm [thread:$0]  %s909, 128, %s906, %s895
        $region44: #{tpu_custom_call.1} parent=39 // pred_fallthru
          _
      $region40: #{tpu_custom_call.1} parent=5 // pred_fallthru
        _
      %p912 = scmp.le.s32.totalorder 2, %s14
      // Predicated region
      $region45: #{tpu_custom_call.1} parent=5 // pred_check
        %p913 = pneg %p912
      $region46: #{tpu_custom_call.1} parent=5 // pred_check_branch
        %915 = sbr.rel (%p913) target = $region48
      $region47: #{tpu_custom_call.1} parent=5 // pred_region
        %s916 = ssub.s32 %s14, 2
        // Predicated region
        $region49: #{tpu_custom_call.1} parent=47 // pred_check
          %p917 = pneg %p153
        $region50: #{tpu_custom_call.1} parent=47 // pred_check_branch
          %919 = sbr.rel (%p917) target = $region52
        $region51: #{tpu_custom_call.1} parent=47 // pred_region
          %s920 = sand.u32 %s138, 1
          %s921 = scalar_lea.sflag [#allocation5], %s920
          %s922 = sand.u32 %s138, 1
          %s923 = smul.addr %s922, 8
          %s924 = scalar_lea.vmem [#allocation4], %s923
          %925 = dma.done %s921, 128
        $region52: #{tpu_custom_call.1} parent=47 // pred_fallthru
          _
      $region48: #{tpu_custom_call.1} parent=5 // pred_fallthru
        _
    $region6: #{tpu_custom_call.1} parent=1 // loop_footer
      %s18 = sadd.s32 1, %s14
    $region7: #{tpu_custom_call.1} parent=1 // loop_footer_branch
      %13 = sbr.rel target = $region3
    $region8: #{tpu_custom_call.1} parent=1 // loop_exit
      _
    %926 = vsyncpa [#allocation5], 1
    %s927 = scalar_lea.sflag [#allocation5], 1
    %928 = vsyncpa %s927, 1

</llo_original>
